<compile_context>
chip_gen: v7x
topology: tpu7x:2x2x1
jax: 0.10.0
libtpu: 0.0.40
codegen_flags: <defaults>
</compile_context>

<pallas_src>
import jax
import jax.numpy as jnp
from jax.experimental import pallas as pl
from jax.experimental.pallas import tpu as pltpu


def _tpe_kernel(x_ref, tab_ref, o_ref):
    # x_ref / o_ref block: (rows_block, C, HW); tab_ref block: (rows_block, C, 1).
    # Single VPU add; the table broadcasts along the lane (spatial) dimension.
    o_ref[...] = x_ref[...] + tab_ref[...]


def _sinusoid_table(T, C):
    """(T, C) float32 sinusoid table matching the PyTorch reference."""
    ic = jnp.arange(C, dtype=jnp.float32)
    dem = jnp.power(jnp.float32(10000.0), 2.0 * jnp.floor(ic / 2.0) / jnp.float32(C))
    it = jnp.arange(T, dtype=jnp.float32)[:, None]            # (T, 1)
    angle = it / dem[None, :]                                  # (T, C)
    even = (jnp.arange(C) % 2) == 0
    return jnp.where(even[None, :], jnp.sin(angle), jnp.cos(angle))


def temporal_position_encoding(x, *, vmem_cap_bytes=4 * 1024 * 1024):
    """x: [B, T, C, H, W] -> same shape, x + temporal sinusoid table."""
    B, T, C, H, W = x.shape
    HW = H * W
    BT = B * T

    # Fuse B and T into one row axis; spatial dims flattened onto lanes.
    x_flat = x.reshape(BT, C, HW)

    # Tiny table computed once outside the grid; broadcast over B so a row
    # block of x pairs with the matching rows of the table.  (BT, C, 1) keeps
    # C on sublanes (like x) and broadcasts over the lane dim inside the kernel.
    table = _sinusoid_table(T, C).astype(x.dtype)
    table = jnp.broadcast_to(table[None, :, :], (B, T, C)).reshape(BT, C, 1)

    # Largest row block whose x buffer stays under vmem_cap_bytes.
    bytes_per_row = C * HW * x.dtype.itemsize
    rows_block = int(max(1, min(BT, vmem_cap_bytes // max(1, bytes_per_row))))
    grid = (pl.cdiv(BT, rows_block),)

    out_flat = pl.pallas_call(
        _tpe_kernel,
        out_shape=jax.ShapeDtypeStruct((BT, C, HW), x.dtype),
        grid_spec=pltpu.PrefetchScalarGridSpec(
            num_scalar_prefetch=0,
            grid=grid,
            in_specs=[
                pl.BlockSpec((rows_block, C, HW), lambda r: (r, 0, 0)),
                pl.BlockSpec((rows_block, C, 1), lambda r: (r, 0, 0)),
            ],
            out_specs=pl.BlockSpec((rows_block, C, HW), lambda r: (r, 0, 0)),
        ),
        compiler_params=pltpu.CompilerParams(
            dimension_semantics=("parallel",),
            # 2 x-in + 2 out buffers at <=4 MiB each + tiny table buffers
            # ~= 16 MiB; raise the scoped-VMEM limit so v5e (16 MiB default)
            # accepts it.  32 MiB is within limits on v6e/v7x too.
            vmem_limit_bytes=32 * 1024 * 1024,
        ),
    )(x_flat, table)

    return out_flat.reshape(B, T, C, H, W)


def _reference(x):
    B, T, C, H, W = x.shape
    ic = jnp.arange(C, dtype=jnp.float32)
    dem = jnp.power(10000.0, 2.0 * jnp.floor(ic / 2.0) / C)[None, :]  # (1, C)
    it = jnp.arange(T, dtype=jnp.float32)[:, None]                    # (T, 1)
    table = it / dem                                                  # (T, C)
    even = (jnp.arange(C) % 2) == 0
    table = jnp.where(even[None, :], jnp.sin(table), jnp.cos(table))
    return x + table[None, :, :, None, None]


if __name__ == "__main__":
    key = jax.random.PRNGKey(0)
    B, T, C, H, W = 2, 8, 32, 16, 16  # d_model = C = 32
    x = jax.random.normal(key, (B, T, C, H, W), dtype=jnp.float32)

    ref = _reference(x)

    out = temporal_position_encoding(x)
    out = jax.block_until_ready(out)

    assert out.shape == x.shape
    assert jnp.allclose(out, ref, atol=1e-5, rtol=1e-5), "mismatch vs reference"

    print("KERNEL_OK")
</pallas_src>

<mosaic_0001>
module attributes {stable_mosaic.version = 11 : i64} {
  func.func @_tpe_kernel(%arg0: i32, %arg1: memref<16x32x256xf32, #tpu.memory_space<vmem>>, %arg2: memref<16x32x1xf32, #tpu.memory_space<vmem>>, %arg3: memref<16x32x256xf32, #tpu.memory_space<vmem>>) attributes {dimension_semantics = [#tpu.dimension_semantics<parallel>], iteration_bounds = array<i64: 1>, scalar_prefetch = 0 : i64, scratch_operands = 0 : i64, tpu.core_type = #tpu.core_type<tc>, window_params = [{transform_indices = @transform_0, window_bounds = array<i64: 16, 32, 256>}, {transform_indices = @transform_1, window_bounds = array<i64: 16, 32, 1>}, {transform_indices = @transform_2, window_bounds = array<i64: 16, 32, 256>}]} {
    %c0 = arith.constant 0 : index
    %c0_0 = arith.constant 0 : index
    %c0_1 = arith.constant 0 : index
    %0 = vector.load %arg1[%c0, %c0_0, %c0_1] : memref<16x32x256xf32, #tpu.memory_space<vmem>>, vector<16x32x256xf32>
    %c0_2 = arith.constant 0 : index
    %c0_3 = arith.constant 0 : index
    %c0_4 = arith.constant 0 : index
    %1 = vector.load %arg2[%c0_2, %c0_3, %c0_4] : memref<16x32x1xf32, #tpu.memory_space<vmem>>, vector<16x32x1xf32>
    %2 = vector.broadcast %1 : vector<16x32x1xf32> to vector<16x32x256xf32>
    %3 = arith.addf %0, %2 : vector<16x32x256xf32>
    %c0_5 = arith.constant 0 : index
    %c0_6 = arith.constant 0 : index
    %c0_7 = arith.constant 0 : index
    %4 = vector.load %arg3[%c0_5, %c0_6, %c0_7] : memref<16x32x256xf32, #tpu.memory_space<vmem>>, vector<16x32x256xf32>
    tpu.vector_store %arg3[%c0_5, %c0_6, %c0_7], %3 {strides = array<i32>} : memref<16x32x256xf32, #tpu.memory_space<vmem>>, vector<16x32x256xf32>,
    return
  }
  func.func @transform_0(%arg0: i32) -> (i32, i32, i32) {
    %c0_i32 = arith.constant 0 : i32
    %c0_i32_0 = arith.constant 0 : i32
    %c0_i32_1 = arith.constant 0 : i32
    return %arg0, %c0_i32, %c0_i32_0 : i32, i32, i32
  }
  func.func @transform_1(%arg0: i32) -> (i32, i32, i32) {
    %c0_i32 = arith.constant 0 : i32
    %c0_i32_0 = arith.constant 0 : i32
    %c0_i32_1 = arith.constant 0 : i32
    return %arg0, %c0_i32, %c0_i32_0 : i32, i32, i32
  }
  func.func @transform_2(%arg0: i32) -> (i32, i32, i32) {
    %c0_i32 = arith.constant 0 : i32
    %c0_i32_0 = arith.constant 0 : i32
    %c0_i32_1 = arith.constant 0 : i32
    return %arg0, %c0_i32, %c0_i32_0 : i32, i32, i32
  }
}

</mosaic_0001>

<llo_original>
// kernel: tpu_custom_call.1
$region0: #{tpu_custom_call.1}
  #allocation0 [shape = 'u32[]', space=smem, size = 0x4, offset = 0x4, fixed_abs, tag = 'smem constant byte address 0x4 - core index']
  #allocation1 [shape = 'u32[144,128]{1,0:T(1,128)}', space=vmem, size = 0x12000, scoped, tag = 'internal scratch']
  %s0 = inlined_call_operand.hbm [shape: f32[16,32,256], index: 0, kind: input, shape index: {}]
  %s1 = inlined_call_operand.vmem [shape: f32[16,32,1], index: 1, kind: input, shape index: {}]
  %s2 = inlined_call_operand.hbm [shape: f32[16,32,256], index: 2, kind: output, shape index: {}]
  %s3 = sld [smem:[#allocation0]]
  $region22: #{tpu_custom_call.1} parent=0
    _
  %s5 = ssub.s32 1, %s3
  %s6 = scalar_select 0, %s5, %s3
  $region1: #{tpu_custom_call.1} parent=0
    #allocation2 [shape = 'u8[524288]{0}', space=vmem, size = 0x80000, scoped, tag = 'input window, operand 0, single buffered']
    #allocation3 [shape = 's32[1]{0}', space=sflag, size = 0x4, scoped, tag = 'scoped memory for tpu_custom_call.1']
    #allocation4 [shape = 's32[1]{0}', space=sflag, size = 0x4, scoped, tag = 'scoped memory for tpu_custom_call.1']
    #allocation5 [shape = 'u8[524288]{0}', space=vmem, size = 0x80000, scoped, tag = 'output window, operand 0, single buffered']
    %7 = vsyncpa [#allocation3], 0
    %8 = vsyncpa [#allocation4], 0
    // Predicated region
    $region2: #{tpu_custom_call.1} parent=1 // pred_check
      _
    $region3: #{tpu_custom_call.1} parent=1 // pred_check_branch
      %10 = sbr.rel (0) target = $region5
    $region4: #{tpu_custom_call.1} parent=1 // pred_region
      %s12 = ssub.s32 16384, 16384
      %13 = vsyncadd [#allocation3], %s12
      %s14 = sshll.u32 [#allocation2], 4
      %s15 = int_to_ptr.vmem [resolvable:$true] %s14
      %20 = dma.hbm_to_vmem [thread:$0]  %s0, 16384, %s15, [#allocation3], 256, 256, 16
    $region5: #{tpu_custom_call.1} parent=1 // pred_fallthru
      _
    // Predicated region
    $region6: #{tpu_custom_call.1} parent=1 // pred_check
      _
    $region7: #{tpu_custom_call.1} parent=1 // pred_check_branch
      %22 = sbr.rel (0) target = $region9
    $region8: #{tpu_custom_call.1} parent=1 // pred_region
      _
    $region9: #{tpu_custom_call.1} parent=1 // pred_fallthru
      _
    // Predicated region
    $region10: #{tpu_custom_call.1} parent=1 // pred_check
      _
    $region11: #{tpu_custom_call.1} parent=1 // pred_check_branch
      %24 = sbr.rel (0) target = $region13
    $region12: #{tpu_custom_call.1} parent=1 // pred_region
      %25 = dma.done [#allocation3], 16384
    $region13: #{tpu_custom_call.1} parent=1 // pred_fallthru
      _
    %v26 = vld [vmem:[#allocation2] sm:$0xff]
    %v27 = vld [vmem:[#allocation2 + $0x8] sm:$0xff]
    %v28 = vld [vmem:[#allocation2 + $0x10] sm:$0xff]
    %v29 = vld [vmem:[#allocation2 + $0x18] sm:$0xff]
    %v30 = vld [vmem:[#allocation2 + $0x20] sm:$0xff]
    %v31 = vld [vmem:[#allocation2 + $0x28] sm:$0xff]
    %v32 = vld [vmem:[#allocation2 + $0x30] sm:$0xff]
    %v33 = vld [vmem:[#allocation2 + $0x38] sm:$0xff]
    %v34 = vld [vmem:[#allocation2 + $0x40] sm:$0xff]
    %v35 = vld [vmem:[#allocation2 + $0x48] sm:$0xff]
    %v36 = vld [vmem:[#allocation2 + $0x50] sm:$0xff]
    %v37 = vld [vmem:[#allocation2 + $0x58] sm:$0xff]
    %v38 = vld [vmem:[#allocation2 + $0x60] sm:$0xff]
    %v39 = vld [vmem:[#allocation2 + $0x68] sm:$0xff]
    %v40 = vld [vmem:[#allocation2 + $0x70] sm:$0xff]
    %v41 = vld [vmem:[#allocation2 + $0x78] sm:$0xff]
    %v42 = vld [vmem:[#allocation2 + $0x80] sm:$0xff]
    %v43 = vld [vmem:[#allocation2 + $0x88] sm:$0xff]
    %v44 = vld [vmem:[#allocation2 + $0x90] sm:$0xff]
    %v45 = vld [vmem:[#allocation2 + $0x98] sm:$0xff]
    %v46 = vld [vmem:[#allocation2 + $0xa0] sm:$0xff]
    %v47 = vld [vmem:[#allocation2 + $0xa8] sm:$0xff]
    %v48 = vld [vmem:[#allocation2 + $0xb0] sm:$0xff]
    %v49 = vld [vmem:[#allocation2 + $0xb8] sm:$0xff]
    %v50 = vld [vmem:[#allocation2 + $0xc0] sm:$0xff]
    %v51 = vld [vmem:[#allocation2 + $0xc8] sm:$0xff]
    %v52 = vld [vmem:[#allocation2 + $0xd0] sm:$0xff]
    %v53 = vld [vmem:[#allocation2 + $0xd8] sm:$0xff]
    %v54 = vld [vmem:[#allocation2 + $0xe0] sm:$0xff]
    %v55 = vld [vmem:[#allocation2 + $0xe8] sm:$0xff]
    %v56 = vld [vmem:[#allocation2 + $0xf0] sm:$0xff]
    %v57 = vld [vmem:[#allocation2 + $0xf8] sm:$0xff]
    %v58 = vld [vmem:[#allocation2 + $0x100] sm:$0xff]
    %v59 = vld [vmem:[#allocation2 + $0x108] sm:$0xff]
    %v60 = vld [vmem:[#allocation2 + $0x110] sm:$0xff]
    %v61 = vld [vmem:[#allocation2 + $0x118] sm:$0xff]
    %v62 = vld [vmem:[#allocation2 + $0x120] sm:$0xff]
    %v63 = vld [vmem:[#allocation2 + $0x128] sm:$0xff]
    %v64 = vld [vmem:[#allocation2 + $0x130] sm:$0xff]
    %v65 = vld [vmem:[#allocation2 + $0x138] sm:$0xff]
    %v66 = vld [vmem:[#allocation2 + $0x140] sm:$0xff]
    %v67 = vld [vmem:[#allocation2 + $0x148] sm:$0xff]
    %v68 = vld [vmem:[#allocation2 + $0x150] sm:$0xff]
    %v69 = vld [vmem:[#allocation2 + $0x158] sm:$0xff]
    %v70 = vld [vmem:[#allocation2 + $0x160] sm:$0xff]
    %v71 = vld [vmem:[#allocation2 + $0x168] sm:$0xff]
    %v72 = vld [vmem:[#allocation2 + $0x170] sm:$0xff]
    %v73 = vld [vmem:[#allocation2 + $0x178] sm:$0xff]
    %v74 = vld [vmem:[#allocation2 + $0x180] sm:$0xff]
    %v75 = vld [vmem:[#allocation2 + $0x188] sm:$0xff]
    %v76 = vld [vmem:[#allocation2 + $0x190] sm:$0xff]
    %v77 = vld [vmem:[#allocation2 + $0x198] sm:$0xff]
    %v78 = vld [vmem:[#allocation2 + $0x1a0] sm:$0xff]
    %v79 = vld [vmem:[#allocation2 + $0x1a8] sm:$0xff]
    %v80 = vld [vmem:[#allocation2 + $0x1b0] sm:$0xff]
    %v81 = vld [vmem:[#allocation2 + $0x1b8] sm:$0xff]
    %v82 = vld [vmem:[#allocation2 + $0x1c0] sm:$0xff]
    %v83 = vld [vmem:[#allocation2 + $0x1c8] sm:$0xff]
    %v84 = vld [vmem:[#allocation2 + $0x1d0] sm:$0xff]
    %v85 = vld [vmem:[#allocation2 + $0x1d8] sm:$0xff]
    %v86 = vld [vmem:[#allocation2 + $0x1e0] sm:$0xff]
    %v87 = vld [vmem:[#allocation2 + $0x1e8] sm:$0xff]
    %v88 = vld [vmem:[#allocation2 + $0x1f0] sm:$0xff]
    %v89 = vld [vmem:[#allocation2 + $0x1f8] sm:$0xff]
    %v90 = vld [vmem:[#allocation2 + $0x200] sm:$0xff]
    %v91 = vld [vmem:[#allocation2 + $0x208] sm:$0xff]
    %v92 = vld [vmem:[#allocation2 + $0x210] sm:$0xff]
    %v93 = vld [vmem:[#allocation2 + $0x218] sm:$0xff]
    %v94 = vld [vmem:[#allocation2 + $0x220] sm:$0xff]
    %v95 = vld [vmem:[#allocation2 + $0x228] sm:$0xff]
    %v96 = vld [vmem:[#allocation2 + $0x230] sm:$0xff]
    %v97 = vld [vmem:[#allocation2 + $0x238] sm:$0xff]
    %v98 = vld [vmem:[#allocation2 + $0x240] sm:$0xff]
    %v99 = vld [vmem:[#allocation2 + $0x248] sm:$0xff]
    %v100 = vld [vmem:[#allocation2 + $0x250] sm:$0xff]
    %v101 = vld [vmem:[#allocation2 + $0x258] sm:$0xff]
    %v102 = vld [vmem:[#allocation2 + $0x260] sm:$0xff]
    %v103 = vld [vmem:[#allocation2 + $0x268] sm:$0xff]
    %v104 = vld [vmem:[#allocation2 + $0x270] sm:$0xff]
    %v105 = vld [vmem:[#allocation2 + $0x278] sm:$0xff]
    %v106 = vld [vmem:[#allocation2 + $0x280] sm:$0xff]
    %v107 = vld [vmem:[#allocation2 + $0x288] sm:$0xff]
    %v108 = vld [vmem:[#allocation2 + $0x290] sm:$0xff]
    %v109 = vld [vmem:[#allocation2 + $0x298] sm:$0xff]
    %v110 = vld [vmem:[#allocation2 + $0x2a0] sm:$0xff]
    %v111 = vld [vmem:[#allocation2 + $0x2a8] sm:$0xff]
    %v112 = vld [vmem:[#allocation2 + $0x2b0] sm:$0xff]
    %v113 = vld [vmem:[#allocation2 + $0x2b8] sm:$0xff]
    %v114 = vld [vmem:[#allocation2 + $0x2c0] sm:$0xff]
    %v115 = vld [vmem:[#allocation2 + $0x2c8] sm:$0xff]
    %v116 = vld [vmem:[#allocation2 + $0x2d0] sm:$0xff]
    %v117 = vld [vmem:[#allocation2 + $0x2d8] sm:$0xff]
    %v118 = vld [vmem:[#allocation2 + $0x2e0] sm:$0xff]
    %v119 = vld [vmem:[#allocation2 + $0x2e8] sm:$0xff]
    %v120 = vld [vmem:[#allocation2 + $0x2f0] sm:$0xff]
    %v121 = vld [vmem:[#allocation2 + $0x2f8] sm:$0xff]
    %v122 = vld [vmem:[#allocation2 + $0x300] sm:$0xff]
    %v123 = vld [vmem:[#allocation2 + $0x308] sm:$0xff]
    %v124 = vld [vmem:[#allocation2 + $0x310] sm:$0xff]
    %v125 = vld [vmem:[#allocation2 + $0x318] sm:$0xff]
    %v126 = vld [vmem:[#allocation2 + $0x320] sm:$0xff]
    %v127 = vld [vmem:[#allocation2 + $0x328] sm:$0xff]
    %v128 = vld [vmem:[#allocation2 + $0x330] sm:$0xff]
    %v129 = vld [vmem:[#allocation2 + $0x338] sm:$0xff]
    %v130 = vld [vmem:[#allocation2 + $0x340] sm:$0xff]
    %v131 = vld [vmem:[#allocation2 + $0x348] sm:$0xff]
    %v132 = vld [vmem:[#allocation2 + $0x350] sm:$0xff]
    %v133 = vld [vmem:[#allocation2 + $0x358] sm:$0xff]
    %v134 = vld [vmem:[#allocation2 + $0x360] sm:$0xff]
    %v135 = vld [vmem:[#allocation2 + $0x368] sm:$0xff]
    %v136 = vld [vmem:[#allocation2 + $0x370] sm:$0xff]
    %v137 = vld [vmem:[#allocation2 + $0x378] sm:$0xff]
    %v138 = vld [vmem:[#allocation2 + $0x380] sm:$0xff]
    %v139 = vld [vmem:[#allocation2 + $0x388] sm:$0xff]
    %v140 = vld [vmem:[#allocation2 + $0x390] sm:$0xff]
    %v141 = vld [vmem:[#allocation2 + $0x398] sm:$0xff]
    %v142 = vld [vmem:[#allocation2 + $0x3a0] sm:$0xff]
    %v143 = vld [vmem:[#allocation2 + $0x3a8] sm:$0xff]
    %v144 = vld [vmem:[#allocation2 + $0x3b0] sm:$0xff]
    %v145 = vld [vmem:[#allocation2 + $0x3b8] sm:$0xff]
    %v146 = vld [vmem:[#allocation2 + $0x3c0] sm:$0xff]
    %v147 = vld [vmem:[#allocation2 + $0x3c8] sm:$0xff]
    %v148 = vld [vmem:[#allocation2 + $0x3d0] sm:$0xff]
    %v149 = vld [vmem:[#allocation2 + $0x3d8] sm:$0xff]
    %v150 = vld [vmem:[#allocation2 + $0x3e0] sm:$0xff]
    %v151 = vld [vmem:[#allocation2 + $0x3e8] sm:$0xff]
    %v152 = vld [vmem:[#allocation2 + $0x3f0] sm:$0xff]
    %v153 = vld [vmem:[#allocation2 + $0x3f8] sm:$0xff]
    %v154 = vld [vmem:[%s1] sm:$0xff]
    %v155 = vld [vmem:[%s1 + $0x8] sm:$0xff]
    %v156 = vld [vmem:[%s1 + $0x10] sm:$0xff]
    %v157 = vld [vmem:[%s1 + $0x18] sm:$0xff]
    %v158 = vld [vmem:[%s1 + $0x20] sm:$0xff]
    %v159 = vld [vmem:[%s1 + $0x28] sm:$0xff]
    %v160 = vld [vmem:[%s1 + $0x30] sm:$0xff]
    %v161 = vld [vmem:[%s1 + $0x38] sm:$0xff]
    %v162 = vld [vmem:[%s1 + $0x40] sm:$0xff]
    %v163 = vld [vmem:[%s1 + $0x48] sm:$0xff]
    %v164 = vld [vmem:[%s1 + $0x50] sm:$0xff]
    %v165 = vld [vmem:[%s1 + $0x58] sm:$0xff]
    %v166 = vld [vmem:[%s1 + $0x60] sm:$0xff]
    %v167 = vld [vmem:[%s1 + $0x68] sm:$0xff]
    %v168 = vld [vmem:[%s1 + $0x70] sm:$0xff]
    %v169 = vld [vmem:[%s1 + $0x78] sm:$0xff]
    %v170 = vld [vmem:[%s1 + $0x80] sm:$0xff]
    %v171 = vld [vmem:[%s1 + $0x88] sm:$0xff]
    %v172 = vld [vmem:[%s1 + $0x90] sm:$0xff]
    %v173 = vld [vmem:[%s1 + $0x98] sm:$0xff]
    %v174 = vld [vmem:[%s1 + $0xa0] sm:$0xff]
    %v175 = vld [vmem:[%s1 + $0xa8] sm:$0xff]
    %v176 = vld [vmem:[%s1 + $0xb0] sm:$0xff]
    %v177 = vld [vmem:[%s1 + $0xb8] sm:$0xff]
    %v178 = vld [vmem:[%s1 + $0xc0] sm:$0xff]
    %v179 = vld [vmem:[%s1 + $0xc8] sm:$0xff]
    %v180 = vld [vmem:[%s1 + $0xd0] sm:$0xff]
    %v181 = vld [vmem:[%s1 + $0xd8] sm:$0xff]
    %v182 = vld [vmem:[%s1 + $0xe0] sm:$0xff]
    %v183 = vld [vmem:[%s1 + $0xe8] sm:$0xff]
    %v184 = vld [vmem:[%s1 + $0xf0] sm:$0xff]
    %v185 = vld [vmem:[%s1 + $0xf8] sm:$0xff]
    %v186 = vld [vmem:[%s1 + $0x100] sm:$0xff]
    %v187 = vld [vmem:[%s1 + $0x108] sm:$0xff]
    %v188 = vld [vmem:[%s1 + $0x110] sm:$0xff]
    %v189 = vld [vmem:[%s1 + $0x118] sm:$0xff]
    %v190 = vld [vmem:[%s1 + $0x120] sm:$0xff]
    %v191 = vld [vmem:[%s1 + $0x128] sm:$0xff]
    %v192 = vld [vmem:[%s1 + $0x130] sm:$0xff]
    %v193 = vld [vmem:[%s1 + $0x138] sm:$0xff]
    %v194 = vld [vmem:[%s1 + $0x140] sm:$0xff]
    %v195 = vld [vmem:[%s1 + $0x148] sm:$0xff]
    %v196 = vld [vmem:[%s1 + $0x150] sm:$0xff]
    %v197 = vld [vmem:[%s1 + $0x158] sm:$0xff]
    %v198 = vld [vmem:[%s1 + $0x160] sm:$0xff]
    %v199 = vld [vmem:[%s1 + $0x168] sm:$0xff]
    %v200 = vld [vmem:[%s1 + $0x170] sm:$0xff]
    %v201 = vld [vmem:[%s1 + $0x178] sm:$0xff]
    %v202 = vld [vmem:[%s1 + $0x180] sm:$0xff]
    %v203 = vld [vmem:[%s1 + $0x188] sm:$0xff]
    %v204 = vld [vmem:[%s1 + $0x190] sm:$0xff]
    %v205 = vld [vmem:[%s1 + $0x198] sm:$0xff]
    %v206 = vld [vmem:[%s1 + $0x1a0] sm:$0xff]
    %v207 = vld [vmem:[%s1 + $0x1a8] sm:$0xff]
    %v208 = vld [vmem:[%s1 + $0x1b0] sm:$0xff]
    %v209 = vld [vmem:[%s1 + $0x1b8] sm:$0xff]
    %v210 = vld [vmem:[%s1 + $0x1c0] sm:$0xff]
    %v211 = vld [vmem:[%s1 + $0x1c8] sm:$0xff]
    %v212 = vld [vmem:[%s1 + $0x1d0] sm:$0xff]
    %v213 = vld [vmem:[%s1 + $0x1d8] sm:$0xff]
    %v214 = vld [vmem:[%s1 + $0x1e0] sm:$0xff]
    %v215 = vld [vmem:[%s1 + $0x1e8] sm:$0xff]
    %v216 = vld [vmem:[%s1 + $0x1f0] sm:$0xff]
    %v217 = vld [vmem:[%s1 + $0x1f8] sm:$0xff]
    %219 = vset.pattern.permute.xlu0 0
    %220 = vperm.xlu0 %219, %v154
    %v221 = vpop.permute.xlu0 %220
    %224 = vset.pattern.permute.xlu0 0
    %225 = vperm.xlu0 %224, %v155
    %v226 = vpop.permute.xlu0 %225
    %229 = vset.pattern.permute.xlu0 0
    %230 = vperm.xlu0 %229, %v156
    %v231 = vpop.permute.xlu0 %230
    %234 = vset.pattern.permute.xlu0 0
    %235 = vperm.xlu0 %234, %v157
    %v236 = vpop.permute.xlu0 %235
    %239 = vset.pattern.permute.xlu0 0
    %240 = vperm.xlu0 %239, %v158
    %v241 = vpop.permute.xlu0 %240
    %244 = vset.pattern.permute.xlu0 0
    %245 = vperm.xlu0 %244, %v159
    %v246 = vpop.permute.xlu0 %245
    %249 = vset.pattern.permute.xlu0 0
    %250 = vperm.xlu0 %249, %v160
    %v251 = vpop.permute.xlu0 %250
    %254 = vset.pattern.permute.xlu0 0
    %255 = vperm.xlu0 %254, %v161
    %v256 = vpop.permute.xlu0 %255
    %259 = vset.pattern.permute.xlu0 0
    %260 = vperm.xlu0 %259, %v162
    %v261 = vpop.permute.xlu0 %260
    %264 = vset.pattern.permute.xlu0 0
    %265 = vperm.xlu0 %264, %v163
    %v266 = vpop.permute.xlu0 %265
    %269 = vset.pattern.permute.xlu0 0
    %270 = vperm.xlu0 %269, %v164
    %v271 = vpop.permute.xlu0 %270
    %274 = vset.pattern.permute.xlu0 0
    %275 = vperm.xlu0 %274, %v165
    %v276 = vpop.permute.xlu0 %275
    %279 = vset.pattern.permute.xlu0 0
    %280 = vperm.xlu0 %279, %v166
    %v281 = vpop.permute.xlu0 %280
    %284 = vset.pattern.permute.xlu0 0
    %285 = vperm.xlu0 %284, %v167
    %v286 = vpop.permute.xlu0 %285
    %289 = vset.pattern.permute.xlu0 0
    %290 = vperm.xlu0 %289, %v168
    %v291 = vpop.permute.xlu0 %290
    %294 = vset.pattern.permute.xlu0 0
    %295 = vperm.xlu0 %294, %v169
    %v296 = vpop.permute.xlu0 %295
    %299 = vset.pattern.permute.xlu0 0
    %300 = vperm.xlu0 %299, %v170
    %v301 = vpop.permute.xlu0 %300
    %304 = vset.pattern.permute.xlu0 0
    %305 = vperm.xlu0 %304, %v171
    %v306 = vpop.permute.xlu0 %305
    %309 = vset.pattern.permute.xlu0 0
    %310 = vperm.xlu0 %309, %v172
    %v311 = vpop.permute.xlu0 %310
    %314 = vset.pattern.permute.xlu0 0
    %315 = vperm.xlu0 %314, %v173
    %v316 = vpop.permute.xlu0 %315
    %319 = vset.pattern.permute.xlu0 0
    %320 = vperm.xlu0 %319, %v174
    %v321 = vpop.permute.xlu0 %320
    %324 = vset.pattern.permute.xlu0 0
    %325 = vperm.xlu0 %324, %v175
    %v326 = vpop.permute.xlu0 %325
    %329 = vset.pattern.permute.xlu0 0
    %330 = vperm.xlu0 %329, %v176
    %v331 = vpop.permute.xlu0 %330
    %334 = vset.pattern.permute.xlu0 0
    %335 = vperm.xlu0 %334, %v177
    %v336 = vpop.permute.xlu0 %335
    %339 = vset.pattern.permute.xlu0 0
    %340 = vperm.xlu0 %339, %v178
    %v341 = vpop.permute.xlu0 %340
    %344 = vset.pattern.permute.xlu0 0
    %345 = vperm.xlu0 %344, %v179
    %v346 = vpop.permute.xlu0 %345
    %349 = vset.pattern.permute.xlu0 0
    %350 = vperm.xlu0 %349, %v180
    %v351 = vpop.permute.xlu0 %350
    %354 = vset.pattern.permute.xlu0 0
    %355 = vperm.xlu0 %354, %v181
    %v356 = vpop.permute.xlu0 %355
    %359 = vset.pattern.permute.xlu0 0
    %360 = vperm.xlu0 %359, %v182
    %v361 = vpop.permute.xlu0 %360
    %364 = vset.pattern.permute.xlu0 0
    %365 = vperm.xlu0 %364, %v183
    %v366 = vpop.permute.xlu0 %365
    %369 = vset.pattern.permute.xlu0 0
    %370 = vperm.xlu0 %369, %v184
    %v371 = vpop.permute.xlu0 %370
    %374 = vset.pattern.permute.xlu0 0
    %375 = vperm.xlu0 %374, %v185
    %v376 = vpop.permute.xlu0 %375
    %379 = vset.pattern.permute.xlu0 0
    %380 = vperm.xlu0 %379, %v186
    %v381 = vpop.permute.xlu0 %380
    %384 = vset.pattern.permute.xlu0 0
    %385 = vperm.xlu0 %384, %v187
    %v386 = vpop.permute.xlu0 %385
    %389 = vset.pattern.permute.xlu0 0
    %390 = vperm.xlu0 %389, %v188
    %v391 = vpop.permute.xlu0 %390
    %394 = vset.pattern.permute.xlu0 0
    %395 = vperm.xlu0 %394, %v189
    %v396 = vpop.permute.xlu0 %395
    %399 = vset.pattern.permute.xlu0 0
    %400 = vperm.xlu0 %399, %v190
    %v401 = vpop.permute.xlu0 %400
    %404 = vset.pattern.permute.xlu0 0
    %405 = vperm.xlu0 %404, %v191
    %v406 = vpop.permute.xlu0 %405
    %409 = vset.pattern.permute.xlu0 0
    %410 = vperm.xlu0 %409, %v192
    %v411 = vpop.permute.xlu0 %410
    %414 = vset.pattern.permute.xlu0 0
    %415 = vperm.xlu0 %414, %v193
    %v416 = vpop.permute.xlu0 %415
    %419 = vset.pattern.permute.xlu0 0
    %420 = vperm.xlu0 %419, %v194
    %v421 = vpop.permute.xlu0 %420
    %424 = vset.pattern.permute.xlu0 0
    %425 = vperm.xlu0 %424, %v195
    %v426 = vpop.permute.xlu0 %425
    %429 = vset.pattern.permute.xlu0 0
    %430 = vperm.xlu0 %429, %v196
    %v431 = vpop.permute.xlu0 %430
    %434 = vset.pattern.permute.xlu0 0
    %435 = vperm.xlu0 %434, %v197
    %v436 = vpop.permute.xlu0 %435
    %439 = vset.pattern.permute.xlu0 0
    %440 = vperm.xlu0 %439, %v198
    %v441 = vpop.permute.xlu0 %440
    %444 = vset.pattern.permute.xlu0 0
    %445 = vperm.xlu0 %444, %v199
    %v446 = vpop.permute.xlu0 %445
    %449 = vset.pattern.permute.xlu0 0
    %450 = vperm.xlu0 %449, %v200
    %v451 = vpop.permute.xlu0 %450
    %454 = vset.pattern.permute.xlu0 0
    %455 = vperm.xlu0 %454, %v201
    %v456 = vpop.permute.xlu0 %455
    %459 = vset.pattern.permute.xlu0 0
    %460 = vperm.xlu0 %459, %v202
    %v461 = vpop.permute.xlu0 %460
    %464 = vset.pattern.permute.xlu0 0
    %465 = vperm.xlu0 %464, %v203
    %v466 = vpop.permute.xlu0 %465
    %469 = vset.pattern.permute.xlu0 0
    %470 = vperm.xlu0 %469, %v204
    %v471 = vpop.permute.xlu0 %470
    %474 = vset.pattern.permute.xlu0 0
    %475 = vperm.xlu0 %474, %v205
    %v476 = vpop.permute.xlu0 %475
    %479 = vset.pattern.permute.xlu0 0
    %480 = vperm.xlu0 %479, %v206
    %v481 = vpop.permute.xlu0 %480
    %484 = vset.pattern.permute.xlu0 0
    %485 = vperm.xlu0 %484, %v207
    %v486 = vpop.permute.xlu0 %485
    %489 = vset.pattern.permute.xlu0 0
    %490 = vperm.xlu0 %489, %v208
    %v491 = vpop.permute.xlu0 %490
    %494 = vset.pattern.permute.xlu0 0
    %495 = vperm.xlu0 %494, %v209
    %v496 = vpop.permute.xlu0 %495
    %499 = vset.pattern.permute.xlu0 0
    %500 = vperm.xlu0 %499, %v210
    %v501 = vpop.permute.xlu0 %500
    %504 = vset.pattern.permute.xlu0 0
    %505 = vperm.xlu0 %504, %v211
    %v506 = vpop.permute.xlu0 %505
    %509 = vset.pattern.permute.xlu0 0
    %510 = vperm.xlu0 %509, %v212
    %v511 = vpop.permute.xlu0 %510
    %514 = vset.pattern.permute.xlu0 0
    %515 = vperm.xlu0 %514, %v213
    %v516 = vpop.permute.xlu0 %515
    %519 = vset.pattern.permute.xlu0 0
    %520 = vperm.xlu0 %519, %v214
    %v521 = vpop.permute.xlu0 %520
    %524 = vset.pattern.permute.xlu0 0
    %525 = vperm.xlu0 %524, %v215
    %v526 = vpop.permute.xlu0 %525
    %529 = vset.pattern.permute.xlu0 0
    %530 = vperm.xlu0 %529, %v216
    %v531 = vpop.permute.xlu0 %530
    %534 = vset.pattern.permute.xlu0 0
    %535 = vperm.xlu0 %534, %v217
    %v536 = vpop.permute.xlu0 %535
    %v538 = vadd.f32 %v26, %v221
    %v539 = vadd.f32 %v27, %v221
    %v540 = vadd.f32 %v28, %v226
    %v541 = vadd.f32 %v29, %v226
    %v542 = vadd.f32 %v30, %v231
    %v543 = vadd.f32 %v31, %v231
    %v544 = vadd.f32 %v32, %v236
    %v545 = vadd.f32 %v33, %v236
    %v546 = vadd.f32 %v34, %v241
    %v547 = vadd.f32 %v35, %v241
    %v548 = vadd.f32 %v36, %v246
    %v549 = vadd.f32 %v37, %v246
    %v550 = vadd.f32 %v38, %v251
    %v551 = vadd.f32 %v39, %v251
    %v552 = vadd.f32 %v40, %v256
    %v553 = vadd.f32 %v41, %v256
    %v554 = vadd.f32 %v42, %v261
    %v555 = vadd.f32 %v43, %v261
    %v556 = vadd.f32 %v44, %v266
    %v557 = vadd.f32 %v45, %v266
    %v558 = vadd.f32 %v46, %v271
    %v559 = vadd.f32 %v47, %v271
    %v560 = vadd.f32 %v48, %v276
    %v561 = vadd.f32 %v49, %v276
    %v562 = vadd.f32 %v50, %v281
    %v563 = vadd.f32 %v51, %v281
    %v564 = vadd.f32 %v52, %v286
    %v565 = vadd.f32 %v53, %v286
    %v566 = vadd.f32 %v54, %v291
    %v567 = vadd.f32 %v55, %v291
    %v568 = vadd.f32 %v56, %v296
    %v569 = vadd.f32 %v57, %v296
    %v570 = vadd.f32 %v58, %v301
    %v571 = vadd.f32 %v59, %v301
    %v572 = vadd.f32 %v60, %v306
    %v573 = vadd.f32 %v61, %v306
    %v574 = vadd.f32 %v62, %v311
    %v575 = vadd.f32 %v63, %v311
    %v576 = vadd.f32 %v64, %v316
    %v577 = vadd.f32 %v65, %v316
    %v578 = vadd.f32 %v66, %v321
    %v579 = vadd.f32 %v67, %v321
    %v580 = vadd.f32 %v68, %v326
    %v581 = vadd.f32 %v69, %v326
    %v582 = vadd.f32 %v70, %v331
    %v583 = vadd.f32 %v71, %v331
    %v584 = vadd.f32 %v72, %v336
    %v585 = vadd.f32 %v73, %v336
    %v586 = vadd.f32 %v74, %v341
    %v587 = vadd.f32 %v75, %v341
    %v588 = vadd.f32 %v76, %v346
    %v589 = vadd.f32 %v77, %v346
    %v590 = vadd.f32 %v78, %v351
    %v591 = vadd.f32 %v79, %v351
    %v592 = vadd.f32 %v80, %v356
    %v593 = vadd.f32 %v81, %v356
    %v594 = vadd.f32 %v82, %v361
    %v595 = vadd.f32 %v83, %v361
    %v596 = vadd.f32 %v84, %v366
    %v597 = vadd.f32 %v85, %v366
    %v598 = vadd.f32 %v86, %v371
    %v599 = vadd.f32 %v87, %v371
    %v600 = vadd.f32 %v88, %v376
    %v601 = vadd.f32 %v89, %v376
    %v602 = vadd.f32 %v90, %v381
    %v603 = vadd.f32 %v91, %v381
    %v604 = vadd.f32 %v92, %v386
    %v605 = vadd.f32 %v93, %v386
    %v606 = vadd.f32 %v94, %v391
    %v607 = vadd.f32 %v95, %v391
    %v608 = vadd.f32 %v96, %v396
    %v609 = vadd.f32 %v97, %v396
    %v610 = vadd.f32 %v98, %v401
    %v611 = vadd.f32 %v99, %v401
    %v612 = vadd.f32 %v100, %v406
    %v613 = vadd.f32 %v101, %v406
    %v614 = vadd.f32 %v102, %v411
    %v615 = vadd.f32 %v103, %v411
    %v616 = vadd.f32 %v104, %v416
    %v617 = vadd.f32 %v105, %v416
    %v618 = vadd.f32 %v106, %v421
    %v619 = vadd.f32 %v107, %v421
    %v620 = vadd.f32 %v108, %v426
    %v621 = vadd.f32 %v109, %v426
    %v622 = vadd.f32 %v110, %v431
    %v623 = vadd.f32 %v111, %v431
    %v624 = vadd.f32 %v112, %v436
    %v625 = vadd.f32 %v113, %v436
    %v626 = vadd.f32 %v114, %v441
    %v627 = vadd.f32 %v115, %v441
    %v628 = vadd.f32 %v116, %v446
    %v629 = vadd.f32 %v117, %v446
    %v630 = vadd.f32 %v118, %v451
    %v631 = vadd.f32 %v119, %v451
    %v632 = vadd.f32 %v120, %v456
    %v633 = vadd.f32 %v121, %v456
    %v634 = vadd.f32 %v122, %v461
    %v635 = vadd.f32 %v123, %v461
    %v636 = vadd.f32 %v124, %v466
    %v637 = vadd.f32 %v125, %v466
    %v638 = vadd.f32 %v126, %v471
    %v639 = vadd.f32 %v127, %v471
    %v640 = vadd.f32 %v128, %v476
    %v641 = vadd.f32 %v129, %v476
    %v642 = vadd.f32 %v130, %v481
    %v643 = vadd.f32 %v131, %v481
    %v644 = vadd.f32 %v132, %v486
    %v645 = vadd.f32 %v133, %v486
    %v646 = vadd.f32 %v134, %v491
    %v647 = vadd.f32 %v135, %v491
    %v648 = vadd.f32 %v136, %v496
    %v649 = vadd.f32 %v137, %v496
    %v650 = vadd.f32 %v138, %v501
    %v651 = vadd.f32 %v139, %v501
    %v652 = vadd.f32 %v140, %v506
    %v653 = vadd.f32 %v141, %v506
    %v654 = vadd.f32 %v142, %v511
    %v655 = vadd.f32 %v143, %v511
    %v656 = vadd.f32 %v144, %v516
    %v657 = vadd.f32 %v145, %v516
    %v658 = vadd.f32 %v146, %v521
    %v659 = vadd.f32 %v147, %v521
    %v660 = vadd.f32 %v148, %v526
    %v661 = vadd.f32 %v149, %v526
    %v662 = vadd.f32 %v150, %v531
    %v663 = vadd.f32 %v151, %v531
    %v664 = vadd.f32 %v152, %v536
    %v665 = vadd.f32 %v153, %v536
    %666 = vst [vmem:[#allocation5] sm:$0xff] %v538
    %667 = vst [vmem:[#allocation5 + $0x8] sm:$0xff] %v539
    %668 = vst [vmem:[#allocation5 + $0x10] sm:$0xff] %v540
    %669 = vst [vmem:[#allocation5 + $0x18] sm:$0xff] %v541
    %670 = vst [vmem:[#allocation5 + $0x20] sm:$0xff] %v542
    %671 = vst [vmem:[#allocation5 + $0x28] sm:$0xff] %v543
    %672 = vst [vmem:[#allocation5 + $0x30] sm:$0xff] %v544
    %673 = vst [vmem:[#allocation5 + $0x38] sm:$0xff] %v545
    %674 = vst [vmem:[#allocation5 + $0x40] sm:$0xff] %v546
    %675 = vst [vmem:[#allocation5 + $0x48] sm:$0xff] %v547
    %676 = vst [vmem:[#allocation5 + $0x50] sm:$0xff] %v548
    %677 = vst [vmem:[#allocation5 + $0x58] sm:$0xff] %v549
    %678 = vst [vmem:[#allocation5 + $0x60] sm:$0xff] %v550
    %679 = vst [vmem:[#allocation5 + $0x68] sm:$0xff] %v551
    %680 = vst [vmem:[#allocation5 + $0x70] sm:$0xff] %v552
    %681 = vst [vmem:[#allocation5 + $0x78] sm:$0xff] %v553
    %682 = vst [vmem:[#allocation5 + $0x80] sm:$0xff] %v554
    %683 = vst [vmem:[#allocation5 + $0x88] sm:$0xff] %v555
    %684 = vst [vmem:[#allocation5 + $0x90] sm:$0xff] %v556
    %685 = vst [vmem:[#allocation5 + $0x98] sm:$0xff] %v557
    %686 = vst [vmem:[#allocation5 + $0xa0] sm:$0xff] %v558
    %687 = vst [vmem:[#allocation5 + $0xa8] sm:$0xff] %v559
    %688 = vst [vmem:[#allocation5 + $0xb0] sm:$0xff] %v560
    %689 = vst [vmem:[#allocation5 + $0xb8] sm:$0xff] %v561
    %690 = vst [vmem:[#allocation5 + $0xc0] sm:$0xff] %v562
    %691 = vst [vmem:[#allocation5 + $0xc8] sm:$0xff] %v563
    %692 = vst [vmem:[#allocation5 + $0xd0] sm:$0xff] %v564
    %693 = vst [vmem:[#allocation5 + $0xd8] sm:$0xff] %v565
    %694 = vst [vmem:[#allocation5 + $0xe0] sm:$0xff] %v566
    %695 = vst [vmem:[#allocation5 + $0xe8] sm:$0xff] %v567
    %696 = vst [vmem:[#allocation5 + $0xf0] sm:$0xff] %v568
    %697 = vst [vmem:[#allocation5 + $0xf8] sm:$0xff] %v569
    %698 = vst [vmem:[#allocation5 + $0x100] sm:$0xff] %v570
    %699 = vst [vmem:[#allocation5 + $0x108] sm:$0xff] %v571
    %700 = vst [vmem:[#allocation5 + $0x110] sm:$0xff] %v572
    %701 = vst [vmem:[#allocation5 + $0x118] sm:$0xff] %v573
    %702 = vst [vmem:[#allocation5 + $0x120] sm:$0xff] %v574
    %703 = vst [vmem:[#allocation5 + $0x128] sm:$0xff] %v575
    %704 = vst [vmem:[#allocation5 + $0x130] sm:$0xff] %v576
    %705 = vst [vmem:[#allocation5 + $0x138] sm:$0xff] %v577
    %706 = vst [vmem:[#allocation5 + $0x140] sm:$0xff] %v578
    %707 = vst [vmem:[#allocation5 + $0x148] sm:$0xff] %v579
    %708 = vst [vmem:[#allocation5 + $0x150] sm:$0xff] %v580
    %709 = vst [vmem:[#allocation5 + $0x158] sm:$0xff] %v581
    %710 = vst [vmem:[#allocation5 + $0x160] sm:$0xff] %v582
    %711 = vst [vmem:[#allocation5 + $0x168] sm:$0xff] %v583
    %712 = vst [vmem:[#allocation5 + $0x170] sm:$0xff] %v584
    %713 = vst [vmem:[#allocation5 + $0x178] sm:$0xff] %v585
    %714 = vst [vmem:[#allocation5 + $0x180] sm:$0xff] %v586
    %715 = vst [vmem:[#allocation5 + $0x188] sm:$0xff] %v587
    %716 = vst [vmem:[#allocation5 + $0x190] sm:$0xff] %v588
    %717 = vst [vmem:[#allocation5 + $0x198] sm:$0xff] %v589
    %718 = vst [vmem:[#allocation5 + $0x1a0] sm:$0xff] %v590
    %719 = vst [vmem:[#allocation5 + $0x1a8] sm:$0xff] %v591
    %720 = vst [vmem:[#allocation5 + $0x1b0] sm:$0xff] %v592
    %721 = vst [vmem:[#allocation5 + $0x1b8] sm:$0xff] %v593
    %722 = vst [vmem:[#allocation5 + $0x1c0] sm:$0xff] %v594
    %723 = vst [vmem:[#allocation5 + $0x1c8] sm:$0xff] %v595
    %724 = vst [vmem:[#allocation5 + $0x1d0] sm:$0xff] %v596
    %725 = vst [vmem:[#allocation5 + $0x1d8] sm:$0xff] %v597
    %726 = vst [vmem:[#allocation5 + $0x1e0] sm:$0xff] %v598
    %727 = vst [vmem:[#allocation5 + $0x1e8] sm:$0xff] %v599
    %728 = vst [vmem:[#allocation5 + $0x1f0] sm:$0xff] %v600
    %729 = vst [vmem:[#allocation5 + $0x1f8] sm:$0xff] %v601
    %730 = vst [vmem:[#allocation5 + $0x200] sm:$0xff] %v602
    %731 = vst [vmem:[#allocation5 + $0x208] sm:$0xff] %v603
    %732 = vst [vmem:[#allocation5 + $0x210] sm:$0xff] %v604
    %733 = vst [vmem:[#allocation5 + $0x218] sm:$0xff] %v605
    %734 = vst [vmem:[#allocation5 + $0x220] sm:$0xff] %v606
    %735 = vst [vmem:[#allocation5 + $0x228] sm:$0xff] %v607
    %736 = vst [vmem:[#allocation5 + $0x230] sm:$0xff] %v608
    %737 = vst [vmem:[#allocation5 + $0x238] sm:$0xff] %v609
    %738 = vst [vmem:[#allocation5 + $0x240] sm:$0xff] %v610
    %739 = vst [vmem:[#allocation5 + $0x248] sm:$0xff] %v611
    %740 = vst [vmem:[#allocation5 + $0x250] sm:$0xff] %v612
    %741 = vst [vmem:[#allocation5 + $0x258] sm:$0xff] %v613
    %742 = vst [vmem:[#allocation5 + $0x260] sm:$0xff] %v614
    %743 = vst [vmem:[#allocation5 + $0x268] sm:$0xff] %v615
    %744 = vst [vmem:[#allocation5 + $0x270] sm:$0xff] %v616
    %745 = vst [vmem:[#allocation5 + $0x278] sm:$0xff] %v617
    %746 = vst [vmem:[#allocation5 + $0x280] sm:$0xff] %v618
    %747 = vst [vmem:[#allocation5 + $0x288] sm:$0xff] %v619
    %748 = vst [vmem:[#allocation5 + $0x290] sm:$0xff] %v620
    %749 = vst [vmem:[#allocation5 + $0x298] sm:$0xff] %v621
    %750 = vst [vmem:[#allocation5 + $0x2a0] sm:$0xff] %v622
    %751 = vst [vmem:[#allocation5 + $0x2a8] sm:$0xff] %v623
    %752 = vst [vmem:[#allocation5 + $0x2b0] sm:$0xff] %v624
    %753 = vst [vmem:[#allocation5 + $0x2b8] sm:$0xff] %v625
    %754 = vst [vmem:[#allocation5 + $0x2c0] sm:$0xff] %v626
    %755 = vst [vmem:[#allocation5 + $0x2c8] sm:$0xff] %v627
    %756 = vst [vmem:[#allocation5 + $0x2d0] sm:$0xff] %v628
    %757 = vst [vmem:[#allocation5 + $0x2d8] sm:$0xff] %v629
    %758 = vst [vmem:[#allocation5 + $0x2e0] sm:$0xff] %v630
    %759 = vst [vmem:[#allocation5 + $0x2e8] sm:$0xff] %v631
    %760 = vst [vmem:[#allocation5 + $0x2f0] sm:$0xff] %v632
    %761 = vst [vmem:[#allocation5 + $0x2f8] sm:$0xff] %v633
    %762 = vst [vmem:[#allocation5 + $0x300] sm:$0xff] %v634
    %763 = vst [vmem:[#allocation5 + $0x308] sm:$0xff] %v635
    %764 = vst [vmem:[#allocation5 + $0x310] sm:$0xff] %v636
    %765 = vst [vmem:[#allocation5 + $0x318] sm:$0xff] %v637
    %766 = vst [vmem:[#allocation5 + $0x320] sm:$0xff] %v638
    %767 = vst [vmem:[#allocation5 + $0x328] sm:$0xff] %v639
    %768 = vst [vmem:[#allocation5 + $0x330] sm:$0xff] %v640
    %769 = vst [vmem:[#allocation5 + $0x338] sm:$0xff] %v641
    %770 = vst [vmem:[#allocation5 + $0x340] sm:$0xff] %v642
    %771 = vst [vmem:[#allocation5 + $0x348] sm:$0xff] %v643
    %772 = vst [vmem:[#allocation5 + $0x350] sm:$0xff] %v644
    %773 = vst [vmem:[#allocation5 + $0x358] sm:$0xff] %v645
    %774 = vst [vmem:[#allocation5 + $0x360] sm:$0xff] %v646
    %775 = vst [vmem:[#allocation5 + $0x368] sm:$0xff] %v647
    %776 = vst [vmem:[#allocation5 + $0x370] sm:$0xff] %v648
    %777 = vst [vmem:[#allocation5 + $0x378] sm:$0xff] %v649
    %778 = vst [vmem:[#allocation5 + $0x380] sm:$0xff] %v650
    %779 = vst [vmem:[#allocation5 + $0x388] sm:$0xff] %v651
    %780 = vst [vmem:[#allocation5 + $0x390] sm:$0xff] %v652
    %781 = vst [vmem:[#allocation5 + $0x398] sm:$0xff] %v653
    %782 = vst [vmem:[#allocation5 + $0x3a0] sm:$0xff] %v654
    %783 = vst [vmem:[#allocation5 + $0x3a8] sm:$0xff] %v655
    %784 = vst [vmem:[#allocation5 + $0x3b0] sm:$0xff] %v656
    %785 = vst [vmem:[#allocation5 + $0x3b8] sm:$0xff] %v657
    %786 = vst [vmem:[#allocation5 + $0x3c0] sm:$0xff] %v658
    %787 = vst [vmem:[#allocation5 + $0x3c8] sm:$0xff] %v659
    %788 = vst [vmem:[#allocation5 + $0x3d0] sm:$0xff] %v660
    %789 = vst [vmem:[#allocation5 + $0x3d8] sm:$0xff] %v661
    %790 = vst [vmem:[#allocation5 + $0x3e0] sm:$0xff] %v662
    %791 = vst [vmem:[#allocation5 + $0x3e8] sm:$0xff] %v663
    %792 = vst [vmem:[#allocation5 + $0x3f0] sm:$0xff] %v664
    %793 = vst [vmem:[#allocation5 + $0x3f8] sm:$0xff] %v665
    // Predicated region
    $region14: #{tpu_custom_call.1} parent=1 // pred_check
      _
    $region15: #{tpu_custom_call.1} parent=1 // pred_check_branch
      %795 = sbr.rel (0) target = $region17
    $region16: #{tpu_custom_call.1} parent=1 // pred_region
      %s797 = ssub.s32 16384, 16384
      %798 = vsyncadd [#allocation4], %s797
      %s799 = sshll.u32 [#allocation5], 4
      %s800 = int_to_ptr.vmem [resolvable:$true] %s799
      %805 = dma.vmem_to_hbm [thread:$0]  %s800, 16384, %s2, [#allocation4], 256, 256, 16
    $region17: #{tpu_custom_call.1} parent=1 // pred_fallthru
      _
    // Predicated region
    $region18: #{tpu_custom_call.1} parent=1 // pred_check
      _
    $region19: #{tpu_custom_call.1} parent=1 // pred_check_branch
      %807 = sbr.rel (0) target = $region21
    $region20: #{tpu_custom_call.1} parent=1 // pred_region
      %808 = dma.done [#allocation4], 16384
    $region21: #{tpu_custom_call.1} parent=1 // pred_fallthru
      _
    %809 = vsyncpa [#allocation3], 1
    %810 = vsyncpa [#allocation4], 1

</llo_original>
